<compile_context>
chip_gen: v5e
topology: v5e:2x2
jax: 0.10.0
libtpu: 0.0.40
codegen_flags: <defaults>
</compile_context>

<pallas_src>
import jax
import jax.numpy as jnp
from jax import lax
from jax.experimental import pallas as pl
from jax.experimental.pallas import tpu as pltpu

IN_DIM, H1, H2, OUT_DIM = 6, 10, 5, 4


def linearnet_kernel(x_ref, w1_ref, b1_ref, w2_ref, b2_ref, w3_ref, b3_ref,
                     out_ref):
    # x_ref: (tb, IN_DIM) — batch-major block straight from HBM.
    x = x_ref[...]

    # Fold the transpose into the matmul: contract the feature axis of BOTH
    # operands -> (H1, tb).  From here on batch lives on the lane axis, so
    # every MXU matmul has N = tb and all stores are lane-dense.
    h1 = lax.dot_general(w1_ref[...], x, (((1,), (1,)), ((), ())),
                         preferred_element_type=jnp.float32)
    h1 = jnp.maximum(h1 + b1_ref[...], 0.0)

    h2 = jnp.dot(w2_ref[...], h1, preferred_element_type=jnp.float32)
    h2 = jnp.maximum(h2 + b2_ref[...], 0.0)

    logits = jnp.dot(w3_ref[...], h2,
                     preferred_element_type=jnp.float32) + b3_ref[...]

    # softmax over features (axis 0 here == dim=1 of the PyTorch (B, 4) output)
    m = jnp.max(logits, axis=0, keepdims=True)
    e = jnp.exp(logits - m)
    denom = jnp.sum(e, axis=0, keepdims=True)
    # EUP approximate reciprocal instead of a VALU divide.
    out_ref[...] = (e * pl.reciprocal(denom, approx=True)).astype(out_ref.dtype)


def _pick_tile(batch, max_tb=8192, min_split_tb=4096):
    """Lane-axis tile (multiple of 128).

    Cap chosen so the lane-padded (tb, 6) input block keeps per-step VMEM
    ~10 MiB (v5e/v7x scoped-VMEM safe).  If the batch is large enough, split
    into >=2 tiles so the parallel grid axis feeds both v7x TensorCores,
    but never shrink tiles below `min_split_tb` (keeps per-step DMA well above
    the ~0.35 us fixed step overhead).
    """
    full = pl.cdiv(batch, 128) * 128
    if full > max_tb:
        return max_tb
    half = pl.cdiv(pl.cdiv(batch, 2), 128) * 128
    if half >= min_split_tb:
        return half
    return full


def linearnet_forward(x, params, *, batch_major_out=True):
    """LinearNet forward: x (B, 6) float32 -> probabilities.

    Returns (B, 4) by default (PyTorch-compatible).  Pass
    batch_major_out=False to get the kernel-native lane-dense (4, B) layout and
    skip the final HBM transpose entirely.
    """
    B = x.shape[0]
    assert x.shape[1] == IN_DIM
    tb = _pick_tile(B)
    n_tiles = pl.cdiv(B, tb)

    w1, b1 = params["w1"], params["b1"]   # (10, 6), (10,)
    w2, b2 = params["w2"], params["b2"]   # (5, 10), (5,)
    w3, b3 = params["w3"], params["b3"]   # (4, 5),  (4,)
    b1c = b1.reshape(H1, 1)
    b2c = b2.reshape(H2, 1)
    b3c = b3.reshape(OUT_DIM, 1)

    full_blk = lambda shp: pl.BlockSpec(shp, lambda i: (0, 0))  # grid-invariant

    # True traffic: only x and out are batch-sized; params are tiny.
    flops = 2 * B * (IN_DIM * H1 + H1 * H2 + H2 * OUT_DIM)
    bytes_accessed = 4 * (B * (IN_DIM + OUT_DIM)
                          + H1 * IN_DIM + H2 * H1 + OUT_DIM * H2
                          + H1 + H2 + OUT_DIM)

    out_t = pl.pallas_call(
        linearnet_kernel,
        out_shape=jax.ShapeDtypeStruct((OUT_DIM, B), jnp.float32),
        grid=(n_tiles,),
        in_specs=[
            pl.BlockSpec((tb, IN_DIM), lambda i: (i, 0)),   # batch-major x tile
            full_blk((H1, IN_DIM)), full_blk((H1, 1)),
            full_blk((H2, H1)), full_blk((H2, 1)),
            full_blk((OUT_DIM, H2)), full_blk((OUT_DIM, 1)),
        ],
        out_specs=pl.BlockSpec((OUT_DIM, tb), lambda i: (0, i)),  # lane-dense
        compiler_params=pltpu.CompilerParams(
            dimension_semantics=("parallel",),
            vmem_limit_bytes=32 * 1024 * 1024),
        cost_estimate=pl.CostEstimate(
            flops=flops,
            transcendentals=B * OUT_DIM,
            bytes_accessed=bytes_accessed),
    )(x.astype(jnp.float32), w1, b1c, w2, b2c, w3, b3c)

    if batch_major_out:
        return out_t.T        # (B, 4) — drop-in PyTorch layout
    return out_t              # (4, B) — keep feature-major, no extra HBM pass


def init_params(key):
    """PyTorch nn.Linear default init: U(-1/sqrt(fan_in), +1/sqrt(fan_in))."""
    ks = jax.random.split(key, 6)

    def lin(kw, kb, fan_out, fan_in):
        bound = 1.0 / jnp.sqrt(float(fan_in))
        w = jax.random.uniform(kw, (fan_out, fan_in), jnp.float32, -bound, bound)
        b = jax.random.uniform(kb, (fan_out,), jnp.float32, -bound, bound)
        return w, b

    w1, b1 = lin(ks[0], ks[1], H1, IN_DIM)
    w2, b2 = lin(ks[2], ks[3], H2, H1)
    w3, b3 = lin(ks[4], ks[5], OUT_DIM, H2)
    return dict(w1=w1, b1=b1, w2=w2, b2=b2, w3=w3, b3=b3)


def linearnet_reference(x, p):
    h1 = jnp.maximum(x @ p["w1"].T + p["b1"], 0.0)
    h2 = jnp.maximum(h1 @ p["w2"].T + p["b2"], 0.0)
    logits = h2 @ p["w3"].T + p["b3"]
    return jax.nn.softmax(logits, axis=1)


if __name__ == "__main__":
    key = jax.random.PRNGKey(0)
    k_param, k_x = jax.random.split(key, 2)

    B = 8
    params = init_params(k_param)
    x = jax.random.normal(k_x, (B, IN_DIM), jnp.float32)

    out = linearnet_forward(x, params)
    out = jax.block_until_ready(out)

    ref = linearnet_reference(x, params)
    assert out.shape == (B, OUT_DIM)
    # Tolerances loosened for the EUP approx-reciprocal softmax denominator.
    assert jnp.allclose(out, ref, atol=2e-3, rtol=2e-3)
    assert jnp.allclose(jnp.sum(out, axis=1), jnp.ones((B,)), atol=2e-3)

    print("KERNEL_OK")
</pallas_src>

<mosaic_0001>
module attributes {stable_mosaic.version = 11 : i64} {
  func.func @linearnet_kernel(%arg0: i32, %arg1: memref<128x6xf32, #tpu.memory_space<vmem>>, %arg2: memref<10x6xf32, #tpu.memory_space<vmem>>, %arg3: memref<10x1xf32, #tpu.memory_space<vmem>>, %arg4: memref<5x10xf32, #tpu.memory_space<vmem>>, %arg5: memref<5x1xf32, #tpu.memory_space<vmem>>, %arg6: memref<4x5xf32, #tpu.memory_space<vmem>>, %arg7: memref<4x1xf32, #tpu.memory_space<vmem>>, %arg8: memref<4x128xf32, #tpu.memory_space<vmem>>) attributes {dimension_semantics = [#tpu.dimension_semantics<parallel>], iteration_bounds = array<i64: 1>, scalar_prefetch = 0 : i64, scratch_operands = 0 : i64, tpu.core_type = #tpu.core_type<tc>, window_params = [{transform_indices = @transform_0, window_bounds = array<i64: 128, 6>}, {pipeline_mode = #tpu.pipeline_mode<synchronous>, transform_indices = @transform_1, window_bounds = array<i64: 10, 6>}, {pipeline_mode = #tpu.pipeline_mode<synchronous>, transform_indices = @transform_2, window_bounds = array<i64: 10, 1>}, {pipeline_mode = #tpu.pipeline_mode<synchronous>, transform_indices = @transform_3, window_bounds = array<i64: 5, 10>}, {pipeline_mode = #tpu.pipeline_mode<synchronous>, transform_indices = @transform_4, window_bounds = array<i64: 5, 1>}, {pipeline_mode = #tpu.pipeline_mode<synchronous>, transform_indices = @transform_5, window_bounds = array<i64: 4, 5>}, {pipeline_mode = #tpu.pipeline_mode<synchronous>, transform_indices = @transform_6, window_bounds = array<i64: 4, 1>}, {transform_indices = @transform_7, window_bounds = array<i64: 4, 128>}]} {
    %c0 = arith.constant 0 : index
    %c0_0 = arith.constant 0 : index
    %0 = vector.load %arg1[%c0, %c0_0] : memref<128x6xf32, #tpu.memory_space<vmem>>, vector<128x6xf32>
    %c0_1 = arith.constant 0 : index
    %c0_2 = arith.constant 0 : index
    %1 = vector.load %arg2[%c0_1, %c0_2] : memref<10x6xf32, #tpu.memory_space<vmem>>, vector<10x6xf32>
    %cst = arith.constant dense<0.000000e+00> : vector<10x128xf32>
    %2 = tpu.matmul %1, %0, %cst {dimension_numbers = #tpu.dot_dimension_numbers<[1], [1], [0], [0], [0, 0, 1, 0], [], []>} : vector<10x6xf32>, vector<128x6xf32>, vector<10x128xf32> -> vector<10x128xf32>
    %c0_3 = arith.constant 0 : index
    %c0_4 = arith.constant 0 : index
    %3 = vector.load %arg3[%c0_3, %c0_4] : memref<10x1xf32, #tpu.memory_space<vmem>>, vector<10x1xf32>
    %4 = vector.broadcast %3 : vector<10x1xf32> to vector<10x128xf32>
    %5 = arith.addf %2, %4 : vector<10x128xf32>
    %cst_5 = arith.constant 0.000000e+00 : f32
    %6 = vector.broadcast %cst_5 : f32 to vector<10x128xf32>
    %7 = arith.maximumf %5, %6 : vector<10x128xf32>
    %c0_6 = arith.constant 0 : index
    %c0_7 = arith.constant 0 : index
    %8 = vector.load %arg4[%c0_6, %c0_7] : memref<5x10xf32, #tpu.memory_space<vmem>>, vector<5x10xf32>
    %cst_8 = arith.constant dense<0.000000e+00> : vector<5x128xf32>
    %9 = tpu.matmul %8, %7, %cst_8 {dimension_numbers = #tpu.dot_dimension_numbers<[1], [0], [0], [1], [0, 0, 1, 1], [], []>} : vector<5x10xf32>, vector<10x128xf32>, vector<5x128xf32> -> vector<5x128xf32>
    %c0_9 = arith.constant 0 : index
    %c0_10 = arith.constant 0 : index
    %10 = vector.load %arg5[%c0_9, %c0_10] : memref<5x1xf32, #tpu.memory_space<vmem>>, vector<5x1xf32>
    %11 = vector.broadcast %10 : vector<5x1xf32> to vector<5x128xf32>
    %12 = arith.addf %9, %11 : vector<5x128xf32>
    %cst_11 = arith.constant 0.000000e+00 : f32
    %13 = vector.broadcast %cst_11 : f32 to vector<5x128xf32>
    %14 = arith.maximumf %12, %13 : vector<5x128xf32>
    %c0_12 = arith.constant 0 : index
    %c0_13 = arith.constant 0 : index
    %15 = vector.load %arg6[%c0_12, %c0_13] : memref<4x5xf32, #tpu.memory_space<vmem>>, vector<4x5xf32>
    %cst_14 = arith.constant dense<0.000000e+00> : vector<4x128xf32>
    %16 = tpu.matmul %15, %14, %cst_14 {dimension_numbers = #tpu.dot_dimension_numbers<[1], [0], [0], [1], [0, 0, 1, 1], [], []>} : vector<4x5xf32>, vector<5x128xf32>, vector<4x128xf32> -> vector<4x128xf32>
    %c0_15 = arith.constant 0 : index
    %c0_16 = arith.constant 0 : index
    %17 = vector.load %arg7[%c0_15, %c0_16] : memref<4x1xf32, #tpu.memory_space<vmem>>, vector<4x1xf32>
    %18 = vector.broadcast %17 : vector<4x1xf32> to vector<4x128xf32>
    %19 = arith.addf %16, %18 : vector<4x128xf32>
    %cst_17 = arith.constant dense<0xFF800000> : vector<128xf32>
    %20 = vector.multi_reduction <maximumf>, %19, %cst_17 [0] : vector<4x128xf32> to vector<128xf32>
    %21 = vector.shape_cast %20 : vector<128xf32> to vector<1x128xf32>
    %22 = vector.broadcast %21 : vector<1x128xf32> to vector<4x128xf32>
    %23 = arith.subf %19, %22 : vector<4x128xf32>
    %24 = math.exp %23 : vector<4x128xf32>
    %cst_18 = arith.constant dense<0.000000e+00> : vector<128xf32>
    %25 = vector.multi_reduction <add>, %24, %cst_18 [0] : vector<4x128xf32> to vector<128xf32>
    %26 = vector.shape_cast %25 : vector<128xf32> to vector<1x128xf32>
    %27 = tpu.reciprocal %26 {approx = true} : vector<1x128xf32> -> vector<1x128xf32>
    %28 = vector.broadcast %27 : vector<1x128xf32> to vector<4x128xf32>
    %29 = arith.mulf %24, %28 : vector<4x128xf32>
    %c0_19 = arith.constant 0 : index
    %c0_20 = arith.constant 0 : index
    %30 = vector.load %arg8[%c0_19, %c0_20] : memref<4x128xf32, #tpu.memory_space<vmem>>, vector<4x128xf32>
    tpu.vector_store %arg8[%c0_19, %c0_20], %29 {strides = array<i32>} : memref<4x128xf32, #tpu.memory_space<vmem>>, vector<4x128xf32>,
    return
  }
  func.func @transform_0(%arg0: i32) -> (i32, i32) {
    %c0_i32 = arith.constant 0 : i32
    %c0_i32_0 = arith.constant 0 : i32
    return %arg0, %c0_i32 : i32, i32
  }
  func.func @transform_1(%arg0: i32) -> (i32, i32) {
    %c0_i32 = arith.constant 0 : i32
    %c0_i32_0 = arith.constant 0 : i32
    %c0_i32_1 = arith.constant 0 : i32
    return %c0_i32, %c0_i32_0 : i32, i32
  }
  func.func @transform_2(%arg0: i32) -> (i32, i32) {
    %c0_i32 = arith.constant 0 : i32
    %c0_i32_0 = arith.constant 0 : i32
    %c0_i32_1 = arith.constant 0 : i32
    return %c0_i32, %c0_i32_0 : i32, i32
  }
  func.func @transform_3(%arg0: i32) -> (i32, i32) {
    %c0_i32 = arith.constant 0 : i32
    %c0_i32_0 = arith.constant 0 : i32
    %c0_i32_1 = arith.constant 0 : i32
    return %c0_i32, %c0_i32_0 : i32, i32
  }
  func.func @transform_4(%arg0: i32) -> (i32, i32) {
    %c0_i32 = arith.constant 0 : i32
    %c0_i32_0 = arith.constant 0 : i32
    %c0_i32_1 = arith.constant 0 : i32
    return %c0_i32, %c0_i32_0 : i32, i32
  }
  func.func @transform_5(%arg0: i32) -> (i32, i32) {
    %c0_i32 = arith.constant 0 : i32
    %c0_i32_0 = arith.constant 0 : i32
    %c0_i32_1 = arith.constant 0 : i32
    return %c0_i32, %c0_i32_0 : i32, i32
  }
  func.func @transform_6(%arg0: i32) -> (i32, i32) {
    %c0_i32 = arith.constant 0 : i32
    %c0_i32_0 = arith.constant 0 : i32
    %c0_i32_1 = arith.constant 0 : i32
    return %c0_i32, %c0_i32_0 : i32, i32
  }
  func.func @transform_7(%arg0: i32) -> (i32, i32) {
    %c0_i32 = arith.constant 0 : i32
    %c0_i32_0 = arith.constant 0 : i32
    return %c0_i32, %arg0 : i32, i32
  }
}

</mosaic_0001>

<llo_original>
// kernel: tpu_custom_call.1
$region0: #{tpu_custom_call.1}
  #allocation0 [shape = 'u32[]', space=smem, size = 0x4, offset = 0x4, fixed_abs, tag = 'smem constant byte address 0x4 - core index']
  #allocation1 [shape = 'u32[72,128]{1,0:T(1,128)}', space=vmem, size = 0x9000, scoped, tag = 'internal scratch']
  %s0 = inlined_call_operand.vmem [shape: f32[8,6], index: 0, kind: input, shape index: {}]
  %s1 = inlined_call_operand.vmem [shape: f32[10,6], index: 1, kind: input, shape index: {}]
  %s2 = inlined_call_operand.vmem [shape: f32[10,1], index: 2, kind: input, shape index: {}]
  %s3 = inlined_call_operand.vmem [shape: f32[5,10], index: 3, kind: input, shape index: {}]
  %s4 = inlined_call_operand.vmem [shape: f32[5,1], index: 4, kind: input, shape index: {}]
  %s5 = inlined_call_operand.vmem [shape: f32[4,5], index: 5, kind: input, shape index: {}]
  %s6 = inlined_call_operand.vmem [shape: f32[4,1], index: 6, kind: input, shape index: {}]
  %s7 = inlined_call_operand.hbm [shape: f32[4,8], index: 7, kind: output, shape index: {}]
  %s8 = sld [smem:[#allocation0]]
  $region38: #{tpu_custom_call.1} parent=0
    _
  %s10 = ssub.s32 1, %s8
  %s11 = scalar_select 0, %s10, %s8
  $region1: #{tpu_custom_call.1} parent=0
    #allocation2 [shape = 'u8[2048]{0}', space=vmem, size = 0x800, scoped, tag = 'output window, operand 0, single buffered']
    #allocation3 [shape = 's32[1]{0}', space=sflag, size = 0x4, scoped, tag = 'scoped memory for tpu_custom_call.1']
    %12 = vsyncpa [#allocation3], 0
    // Predicated region
    $region2: #{tpu_custom_call.1} parent=1 // pred_check
      _
    $region3: #{tpu_custom_call.1} parent=1 // pred_check_branch
      %14 = sbr.rel (0) target = $region5
    $region4: #{tpu_custom_call.1} parent=1 // pred_region
      _
    $region5: #{tpu_custom_call.1} parent=1 // pred_fallthru
      _
    // Predicated region
    $region6: #{tpu_custom_call.1} parent=1 // pred_check
      _
    $region7: #{tpu_custom_call.1} parent=1 // pred_check_branch
      %16 = sbr.rel (0) target = $region9
    $region8: #{tpu_custom_call.1} parent=1 // pred_region
      _
    $region9: #{tpu_custom_call.1} parent=1 // pred_fallthru
      _
    // Predicated region
    $region10: #{tpu_custom_call.1} parent=1 // pred_check
      _
    $region11: #{tpu_custom_call.1} parent=1 // pred_check_branch
      %18 = sbr.rel (0) target = $region13
    $region12: #{tpu_custom_call.1} parent=1 // pred_region
      _
    $region13: #{tpu_custom_call.1} parent=1 // pred_fallthru
      _
    // Predicated region
    $region14: #{tpu_custom_call.1} parent=1 // pred_check
      _
    $region15: #{tpu_custom_call.1} parent=1 // pred_check_branch
      %20 = sbr.rel (0) target = $region17
    $region16: #{tpu_custom_call.1} parent=1 // pred_region
      _
    $region17: #{tpu_custom_call.1} parent=1 // pred_fallthru
      _
    // Predicated region
    $region18: #{tpu_custom_call.1} parent=1 // pred_check
      _
    $region19: #{tpu_custom_call.1} parent=1 // pred_check_branch
      %22 = sbr.rel (0) target = $region21
    $region20: #{tpu_custom_call.1} parent=1 // pred_region
      _
    $region21: #{tpu_custom_call.1} parent=1 // pred_fallthru
      _
    // Predicated region
    $region22: #{tpu_custom_call.1} parent=1 // pred_check
      _
    $region23: #{tpu_custom_call.1} parent=1 // pred_check_branch
      %24 = sbr.rel (0) target = $region25
    $region24: #{tpu_custom_call.1} parent=1 // pred_region
      _
    $region25: #{tpu_custom_call.1} parent=1 // pred_fallthru
      _
    // Predicated region
    $region26: #{tpu_custom_call.1} parent=1 // pred_check
      _
    $region27: #{tpu_custom_call.1} parent=1 // pred_check_branch
      %26 = sbr.rel (0) target = $region29
    $region28: #{tpu_custom_call.1} parent=1 // pred_region
      _
    $region29: #{tpu_custom_call.1} parent=1 // pred_fallthru
      _
    %v27 = vld [vmem:[%s0] sm:$0xff]
    %v28 = vld [vmem:[%s0 + $0x8] sm:$0xff]
    %v29 = vld [vmem:[%s0 + $0x10] sm:$0xff]
    %v30 = vld [vmem:[%s0 + $0x18] sm:$0xff]
    %v31 = vld [vmem:[%s0 + $0x20] sm:$0xff]
    %v32 = vld [vmem:[%s0 + $0x28] sm:$0xff]
    %v33 = vld [vmem:[%s0 + $0x30] sm:$0xff]
    %v34 = vld [vmem:[%s0 + $0x38] sm:$0xff]
    %v35 = vld [vmem:[%s0 + $0x40] sm:$0xff]
    %v36 = vld [vmem:[%s0 + $0x48] sm:$0xff]
    %v37 = vld [vmem:[%s0 + $0x50] sm:$0xff]
    %v38 = vld [vmem:[%s0 + $0x58] sm:$0xff]
    %v39 = vld [vmem:[%s0 + $0x60] sm:$0xff]
    %v40 = vld [vmem:[%s0 + $0x68] sm:$0xff]
    %v41 = vld [vmem:[%s0 + $0x70] sm:$0xff]
    %v42 = vld [vmem:[%s0 + $0x78] sm:$0xff]
    %v43 = vld [vmem:[%s1] sm:$0xff]
    %v44 = vld [vmem:[%s1 + $0x8] sm:$0x3]
    %v45 = vld [vmem:[%s2] sm:$0xff]
    %v46 = vld [vmem:[%s2 + $0x8] sm:$0x3]
    %48 = vset.pattern.permute.xlu0 0
    %49 = vperm.xlu0 %48, %v45
    %v50 = vpop.permute.xlu0 %49
    %53 = vset.pattern.permute.xlu0 0
    %54 = vperm.xlu0 %53, %v46
    %v55 = vpop.permute.xlu0 %54
    %vm57 = vcmask 48128
    %v59 = vsel %vm57, %v43, 0
    %v62 = vsel %vm57, %v44, 0
    %v65 = vsel %vm57, %v27, 0
    %v68 = vsel %vm57, %v28, 0
    %v71 = vsel %vm57, %v29, 0
    %v74 = vsel %vm57, %v30, 0
    %v77 = vsel %vm57, %v31, 0
    %v80 = vsel %vm57, %v32, 0
    %v83 = vsel %vm57, %v33, 0
    %v86 = vsel %vm57, %v34, 0
    %v89 = vsel %vm57, %v35, 0
    %v92 = vsel %vm57, %v36, 0
    %v95 = vsel %vm57, %v37, 0
    %v98 = vsel %vm57, %v38, 0
    %v101 = vsel %vm57, %v39, 0
    %v104 = vsel %vm57, %v40, 0
    %v107 = vsel %vm57, %v41, 0
    %v110 = vsel %vm57, %v42, 0
    %112 = vmatpush.xpose.msra.mxu0 %v110
    %113 = vmatpush.xpose.msra.mxu0 %v107
    %114 = vmatpush.xpose.msra.mxu0 %v104
    %115 = vmatpush.xpose.msra.mxu0 %v101
    %116 = vmatpush.xpose.msra.mxu0 %v98
    %117 = vmatpush.xpose.msra.mxu0 %v95
    %118 = vmatpush.xpose.msra.mxu0 %v92
    %119 = vmatpush.xpose.msra.mxu0 %v89
    %120 = vmatpush.xpose.msra.mxu0 %v86
    %121 = vmatpush.xpose.msra.mxu0 %v83
    %122 = vmatpush.xpose.msra.mxu0 %v80
    %123 = vmatpush.xpose.msra.mxu0 %v77
    %124 = vmatpush.xpose.msra.mxu0 %v74
    %125 = vmatpush.xpose.msra.mxu0 %v71
    %126 = vmatpush.xpose.msra.mxu0 %v68
    %127 = vmatpush.xpose.msra.mxu0 %v65
    %128 = vmatmul.f32.gmra.mxu0 %v59
    %v129 = vpop.f32.mrf.mxu0
    %v130 = vadd.f32 %v50, %v129
    %131 = vmatmul.f32.gmra.mxu0 %v62
    %v132 = vpop.f32.mrf.mxu0
    %v133 = vadd.f32 %v55, %v132
    %134 = vdwg.mxu0
    %v135 = vmax.f32 %v130, 0.0
    %v136 = vmax.f32 %v133, 0.0
    %v137 = vld [vmem:[%s3] sm:$0x1f]
    %v138 = vld [vmem:[%s4] sm:$0x1f]
    %140 = vset.pattern.permute.xlu0 0
    %141 = vperm.xlu0 %140, %v138
    %v142 = vpop.permute.xlu0 %141
    %vm144 = vcmask 80896
    %v146 = vsel %vm144, %v137, 0
    %vm148 = vcmask 1041408
    %v150 = vsel %vm148, %v136, 0
    %152 = vmatpush.msra.mxu0 0.0
    %153 = vmatpush.msra.mxu0 0.0
    %154 = vmatpush.msra.mxu0 0.0
    %155 = vmatpush.msra.mxu0 0.0
    %156 = vmatpush.msra.mxu0 0.0
    %157 = vmatpush.msra.mxu0 0.0
    %158 = vmatpush.msra.mxu0 0.0
    %159 = vmatpush.msra.mxu0 0.0
    %160 = vmatpush.msra.mxu0 0.0
    %161 = vmatpush.msra.mxu0 0.0
    %162 = vmatpush.msra.mxu0 0.0
    %163 = vmatpush.msra.mxu0 0.0
    %164 = vmatpush.msra.mxu0 0.0
    %165 = vmatpush.msra.mxu0 0.0
    %166 = vmatpush.msra.mxu0 %v150
    %167 = vmatpush.msra.mxu0 %v135
    %168 = vmatmul.f32.gmra.mxu0 %v146
    %v169 = vpop.f32.mrf.mxu0
    %v170 = vadd.f32 %v142, %v169
    %171 = vdwg.mxu0
    %v172 = vmax.f32 %v170, 0.0
    %v173 = vld [vmem:[%s5] sm:$0xf]
    %v174 = vld [vmem:[%s6] sm:$0xf]
    %176 = vset.pattern.permute.xlu0 0
    %177 = vperm.xlu0 %176, %v174
    %v178 = vpop.permute.xlu0 %177
    %vm180 = vcmask 39936
    %v182 = vsel %vm180, %v173, 0
    %vm184 = vcmask 1044480
    %v186 = vsel %vm184, %v172, 0
    %188 = vmatpush.msra.mxu0 0.0
    %189 = vmatpush.msra.mxu0 0.0
    %190 = vmatpush.msra.mxu0 0.0
    %191 = vmatpush.msra.mxu0 0.0
    %192 = vmatpush.msra.mxu0 0.0
    %193 = vmatpush.msra.mxu0 0.0
    %194 = vmatpush.msra.mxu0 0.0
    %195 = vmatpush.msra.mxu0 0.0
    %196 = vmatpush.msra.mxu0 0.0
    %197 = vmatpush.msra.mxu0 0.0
    %198 = vmatpush.msra.mxu0 0.0
    %199 = vmatpush.msra.mxu0 0.0
    %200 = vmatpush.msra.mxu0 0.0
    %201 = vmatpush.msra.mxu0 0.0
    %202 = vmatpush.msra.mxu0 0.0
    %203 = vmatpush.msra.mxu0 %v186
    %204 = vmatmul.f32.gmra.mxu0 %v182
    %v205 = vpop.f32.mrf.mxu0
    %v206 = vadd.f32 %v178, %v205
    %207 = vdwg.mxu0
    %vm208 = vcmask 1043456
    %v209 = vsel %vm208, %v206, -inf
    %v210 = vrot.slane %v209, 4
    %v211 = vmax.f32 %v209, %v210
    %v212 = vrot.slane %v211, 2
    %v213 = vmax.f32 %v211, %v212
    %v214 = vrot.slane %v213, 1
    %v215 = vmax.f32 %v213, %v214
    %v216 = vsub.f32 %v206, %v215
    %v217 = vmul.f32 %v216, 1.442695
    %v218 = vpow.pop %v217
    %v219 = vsel %vm208, %v218, 0.0
    %v220 = vrot.slane %v219, 4
    %v221 = vadd.f32 %v219, %v220
    %v222 = vrot.slane %v221, 2
    %v223 = vadd.f32 %v221, %v222
    %v224 = vrot.slane %v223, 1
    %v225 = vadd.f32 %v223, %v224
    %v226 = vrcp.pop %v225
    %v227 = vmul.f32 %v218, %v226
    %228 = vst [vmem:[#allocation2] sm:$0xf] %v227
    // Predicated region
    $region30: #{tpu_custom_call.1} parent=1 // pred_check
      _
    $region31: #{tpu_custom_call.1} parent=1 // pred_check_branch
      %230 = sbr.rel (0) target = $region33
    $region32: #{tpu_custom_call.1} parent=1 // pred_region
      %232 = vsyncadd [#allocation3], 0
      %s234 = sshll.u32 [#allocation2], 4
      %s235 = int_to_ptr.vmem [resolvable:$true] %s234
      %s236 = sshll.u32 %s7, 4
      %s237 = int_to_ptr.hbm [resolvable:$true] %s236
      %239 = dma.vmem_to_hbm [thread:$0]  %s235, 64, %s237, [#allocation3]
    $region33: #{tpu_custom_call.1} parent=1 // pred_fallthru
      _
    // Predicated region
    $region34: #{tpu_custom_call.1} parent=1 // pred_check
      _
    $region35: #{tpu_custom_call.1} parent=1 // pred_check_branch
      %241 = sbr.rel (0) target = $region37
    $region36: #{tpu_custom_call.1} parent=1 // pred_region
      %243 = dma.done [#allocation3], 64
    $region37: #{tpu_custom_call.1} parent=1 // pred_fallthru
      _
    %244 = vsyncpa [#allocation3], 1

</llo_original>
